<compile_context>
chip_gen: v6e
topology: v6e:2x2x1
jax: 0.10.0
libtpu: 0.0.40
codegen_flags: <defaults>
</compile_context>

<pallas_src>
import functools
from math import sqrt

import jax
import jax.numpy as jnp
import numpy as np
from jax import lax
from jax.experimental import pallas as pl
from jax.experimental.pallas import tpu as pltpu


def _round_up(x, m):
    return ((x + m - 1) // m) * m


def _pick_h_tile(H_out, W_out, min_m=128):
    """Output rows per grid step.

    Prefer >= 2 H-tiles (enough grid steps for pipelined output writeback)
    while keeping M = TH * W_out >= min_m rows per MXU push. Falls back to the
    whole height when that is not possible.
    """
    divisors = [t for t in range(1, H_out + 1) if H_out % t == 0]
    multi = [t for t in divisors if t < H_out and t * W_out >= min_m]
    if multi:
        return max(multi)
    big = [t for t in divisors if t * W_out >= min_m]
    if big:
        return min(big)
    return H_out


def _dilated_conv_kernel(x_ref, w_ref, o_ref, *, kH, kW, d, stride, TH, W_out):
    """One (batch, H-tile) grid step.

    x_ref : (H_pad, W_pad, Cin)     padded input image of this batch element
    w_ref : (kH*kW*Cin, Cout_pad)   im2col-packed weight (lane-dense N)
    o_ref : (TH, W_out, Cout_pad)   output tile (lane-dense, unmasked stores)
    """
    Cin = x_ref.shape[-1]
    Cout_pad = o_ref.shape[-1]
    M = TH * W_out

    t = pl.program_id(1)
    h_base = pl.multiple_of(t * (TH * stride), TH * stride)

    mxu_dtype = w_ref.dtype
    taps = []
    for kh in range(kH):
        for kw in range(kW):
            if stride == 1:
                sl = x_ref[pl.ds(h_base + kh * d, TH),
                           pl.ds(kw * d, W_out), :]
            else:
                # TODO(synk): for stride > 1, express the decimation via the
                # BlockSpec / index_map instead of a strided in-register slice.
                blk = x_ref[pl.ds(h_base + kh * d, (TH - 1) * stride + 1),
                            pl.ds(kw * d, (W_out - 1) * stride + 1), :]
                sl = lax.slice(blk, (0, 0, 0), blk.shape, (stride, stride, 1))
            # Cast per tap (halves the data volume of the concatenate when the
            # MXU dtype is bf16); merging leading dims is a layout-free reshape.
            taps.append(sl.astype(mxu_dtype).reshape(M, Cin))

    # im2col patch matrix -> a single MXU matmul with K = kH*kW*Cin.
    patch = jnp.concatenate(taps, axis=-1)                      # (M, kH*kW*Cin)
    out = jnp.dot(patch, w_ref[...],
                  preferred_element_type=jnp.float32)           # (M, Cout_pad)
    o_ref[...] = out.reshape(TH, W_out, Cout_pad).astype(o_ref.dtype)


def cdilated_forward(x_nchw, weight_oihw, *, kSize, stride=1, d=1,
                     mxu_dtype=jnp.bfloat16):
    """CDilated forward: dilated conv2d, padding = ((k-1)//2)*d, no bias.

    mxu_dtype: dtype of the MXU inputs (accumulation is always f32).
               Use jnp.float32 for bit-faithful f32 semantics.
    """
    N, Cin, H, W = x_nchw.shape
    Cout = weight_oihw.shape[0]
    kH = kW = kSize
    padding = ((kSize - 1) // 2) * d

    # ---- glue (plain JAX): layout, zero pad, weight packing ---------------
    x_nhwc = jnp.transpose(x_nchw, (0, 2, 3, 1))
    x_pad = jnp.pad(x_nhwc,
                    ((0, 0), (padding, padding), (padding, padding), (0, 0)))

    H_pad, W_pad = H + 2 * padding, W + 2 * padding
    H_out = (H_pad - (kH - 1) * d - 1) // stride + 1
    W_out = (W_pad - (kW - 1) * d - 1) // stride + 1

    # im2col-packed weight: rows ordered (kh, kw, ci) to match the kernel's
    # patch construction; output channels zero-padded to a full 128-lane
    # granule so output stores are unmasked. Cast to the MXU dtype once here.
    Cout_pad = _round_up(max(Cout, 128), 128)
    K = kH * kW * Cin
    w_mat = jnp.transpose(weight_oihw, (2, 3, 1, 0)).reshape(K, Cout)
    w_mat = jnp.pad(w_mat, ((0, 0), (0, Cout_pad - Cout))).astype(mxu_dtype)

    TH = _pick_h_tile(H_out, W_out)
    n_h = H_out // TH

    kernel = functools.partial(
        _dilated_conv_kernel,
        kH=kH, kW=kW, d=d, stride=stride, TH=TH, W_out=W_out)

    # Rough VMEM budget: double-buffered input image + weight + output tile.
    # Accounts for the Mosaic (sublane, lane) tile padding of the minor dims.
    def vmem_block_bytes(shape, dtype):
        *lead, s, l = shape
        itemsize = jnp.dtype(dtype).itemsize
        sub = 8 * max(1, 4 // itemsize)            # sublane granule (packed dtypes)
        lead_n = int(np.prod(lead)) if lead else 1
        return lead_n * _round_up(s, sub) * _round_up(l, 128) * itemsize

    est = (2 * vmem_block_bytes((H_pad, W_pad, Cin), x_pad.dtype)
           + 2 * vmem_block_bytes(w_mat.shape, w_mat.dtype)
           + 2 * vmem_block_bytes((TH, W_out, Cout_pad), x_nchw.dtype)
           + (4 << 20))
    vmem_limit = int(min(max(est, 32 << 20), 64 << 20))
    # TODO(synk): for very large spatial inputs (v7x has only 64 MiB VMEM),
    # tile the *input* over H with a (kH-1)*d halo (manual DMA) instead of
    # keeping the whole padded image resident per batch element.

    out_dtype = x_nchw.dtype
    cost = pl.CostEstimate(
        flops=2 * N * H_out * W_out * K * Cout_pad,
        transcendentals=0,
        bytes_accessed=int(x_pad.size * x_pad.dtype.itemsize
                           + w_mat.size * w_mat.dtype.itemsize
                           + N * H_out * W_out * Cout_pad
                           * jnp.dtype(out_dtype).itemsize))

    out_padded = pl.pallas_call(
        kernel,
        out_shape=jax.ShapeDtypeStruct((N, H_out, W_out, Cout_pad), out_dtype),
        grid_spec=pltpu.PrefetchScalarGridSpec(
            num_scalar_prefetch=0,
            grid=(N, n_h),
            in_specs=[
                # whole padded image per batch element; stays resident across
                # the H-tile axis (block index does not depend on t).
                pl.BlockSpec((pl.Squeezed(), H_pad, W_pad, Cin),
                             lambda b, t: (b, 0, 0, 0)),
                # packed weight, same block every step (fetched once).
                pl.BlockSpec((K, Cout_pad), lambda b, t: (0, 0)),
            ],
            out_specs=pl.BlockSpec((pl.Squeezed(), TH, W_out, Cout_pad),
                                   lambda b, t: (b, t, 0, 0)),
        ),
        compiler_params=pltpu.CompilerParams(
            # No cross-step carried state: both axes are independent.
            dimension_semantics=("parallel", "parallel"),
            vmem_limit_bytes=vmem_limit),
        cost_estimate=cost,
    )(x_pad, w_mat)

    out_nhwc = out_padded[..., :Cout]             # drop the lane padding
    return jnp.transpose(out_nhwc, (0, 3, 1, 2))  # back to NCHW


if __name__ == "__main__":
    # CDilated(nIn=4, nOut=8, kSize=3, stride=1, d=2)
    nIn, nOut, kSize, stride, d = 4, 8, 3, 1, 2
    N, H, W = 2, 16, 16

    key = jax.random.PRNGKey(0)
    kx, kw = jax.random.split(key)

    x = jax.random.normal(kx, (N, nIn, H, W), dtype=jnp.float32)

    # Deterministic weight init (kaiming-uniform-like bound, nn.Conv2d default)
    fan_in = nIn * kSize * kSize
    bound = 1.0 / sqrt(fan_in)
    weight = jax.random.uniform(kw, (nOut, nIn, kSize, kSize),
                                dtype=jnp.float32, minval=-bound, maxval=bound)

    # Reference: XLA conv with full f32 precision (same semantics as PyTorch).
    padding = ((kSize - 1) // 2) * d
    ref = lax.conv_general_dilated(
        x, weight,
        window_strides=(stride, stride),
        padding=((padding, padding), (padding, padding)),
        rhs_dilation=(d, d),
        dimension_numbers=("NCHW", "OIHW", "NCHW"),
        precision=lax.Precision.HIGHEST,
    )
    ref = np.asarray(jax.block_until_ready(ref))

    # Exact-semantics path (f32 MXU inputs).
    out_f32 = cdilated_forward(x, weight, kSize=kSize, stride=stride, d=d,
                               mxu_dtype=jnp.float32)
    out_f32 = np.asarray(jax.block_until_ready(out_f32))
    np.testing.assert_allclose(out_f32, ref, rtol=1e-4, atol=1e-5)

    # Default fast path (bf16 MXU inputs, f32 accumulation).
    out_bf16 = cdilated_forward(x, weight, kSize=kSize, stride=stride, d=d)
    out_bf16 = np.asarray(jax.block_until_ready(out_bf16))
    np.testing.assert_allclose(out_bf16, ref, rtol=2e-2, atol=2e-2)

    print("KERNEL_OK")
</pallas_src>

<mosaic_0001>
module attributes {stable_mosaic.version = 11 : i64} {
  func.func @_dilated_conv_kernel(%arg0: i32, %arg1: i32, %arg2: memref<1x20x20x4xf32, #tpu.memory_space<vmem>>, %arg3: memref<36x128xf32, #tpu.memory_space<vmem>>, %arg4: memref<1x8x16x128xf32, #tpu.memory_space<vmem>>) attributes {dimension_semantics = [#tpu.dimension_semantics<parallel>, #tpu.dimension_semantics<parallel>], iteration_bounds = array<i64: 2, 2>, scalar_prefetch = 0 : i64, scratch_operands = 0 : i64, tpu.core_type = #tpu.core_type<tc>, window_params = [{transform_indices = @transform_0, window_bounds = array<i64: 1, 20, 20, 4>}, {pipeline_mode = #tpu.pipeline_mode<synchronous>, transform_indices = @transform_1, window_bounds = array<i64: 36, 128>}, {transform_indices = @transform_2, window_bounds = array<i64: 1, 8, 16, 128>}]} {
    %c8_i32 = arith.constant 8 : i32
    %0 = arith.muli %arg1, %c8_i32 : i32
    %1 = tpu.assume_multiple %0, 8 : i32
    %c0_i32 = arith.constant 0 : i32
    %2 = arith.addi %1, %c0_i32 : i32
    %c0 = arith.constant 0 : index
    %3 = arith.index_cast %2 : i32 to index
    %c0_0 = arith.constant 0 : index
    %c0_1 = arith.constant 0 : index
    %4 = vector.load %arg2[%c0, %3, %c0_0, %c0_1] : memref<1x20x20x4xf32, #tpu.memory_space<vmem>>, vector<1x8x16x4xf32>
    %5 = vector.shape_cast %4 : vector<1x8x16x4xf32> to vector<8x16x4xf32>
    %6 = vector.shape_cast %5 : vector<8x16x4xf32> to vector<128x4xf32>
    %c0_i32_2 = arith.constant 0 : i32
    %7 = arith.addi %1, %c0_i32_2 : i32
    %c0_3 = arith.constant 0 : index
    %8 = arith.index_cast %7 : i32 to index
    %c2 = arith.constant 2 : index
    %c0_4 = arith.constant 0 : index
    %9 = vector.load %arg2[%c0_3, %8, %c2, %c0_4] : memref<1x20x20x4xf32, #tpu.memory_space<vmem>>, vector<1x8x16x4xf32>
    %10 = vector.shape_cast %9 : vector<1x8x16x4xf32> to vector<8x16x4xf32>
    %11 = vector.shape_cast %10 : vector<8x16x4xf32> to vector<128x4xf32>
    %c0_i32_5 = arith.constant 0 : i32
    %12 = arith.addi %1, %c0_i32_5 : i32
    %c0_6 = arith.constant 0 : index
    %13 = arith.index_cast %12 : i32 to index
    %c4 = arith.constant 4 : index
    %c0_7 = arith.constant 0 : index
    %14 = vector.load %arg2[%c0_6, %13, %c4, %c0_7] : memref<1x20x20x4xf32, #tpu.memory_space<vmem>>, vector<1x8x16x4xf32>
    %15 = vector.shape_cast %14 : vector<1x8x16x4xf32> to vector<8x16x4xf32>
    %16 = vector.shape_cast %15 : vector<8x16x4xf32> to vector<128x4xf32>
    %c2_i32 = arith.constant 2 : i32
    %17 = arith.addi %1, %c2_i32 : i32
    %c0_8 = arith.constant 0 : index
    %18 = arith.index_cast %17 : i32 to index
    %c0_9 = arith.constant 0 : index
    %c0_10 = arith.constant 0 : index
    %19 = vector.load %arg2[%c0_8, %18, %c0_9, %c0_10] : memref<1x20x20x4xf32, #tpu.memory_space<vmem>>, vector<1x8x16x4xf32>
    %20 = vector.shape_cast %19 : vector<1x8x16x4xf32> to vector<8x16x4xf32>
    %21 = vector.shape_cast %20 : vector<8x16x4xf32> to vector<128x4xf32>
    %c2_i32_11 = arith.constant 2 : i32
    %22 = arith.addi %1, %c2_i32_11 : i32
    %c0_12 = arith.constant 0 : index
    %23 = arith.index_cast %22 : i32 to index
    %c2_13 = arith.constant 2 : index
    %c0_14 = arith.constant 0 : index
    %24 = vector.load %arg2[%c0_12, %23, %c2_13, %c0_14] : memref<1x20x20x4xf32, #tpu.memory_space<vmem>>, vector<1x8x16x4xf32>
    %25 = vector.shape_cast %24 : vector<1x8x16x4xf32> to vector<8x16x4xf32>
    %26 = vector.shape_cast %25 : vector<8x16x4xf32> to vector<128x4xf32>
    %c2_i32_15 = arith.constant 2 : i32
    %27 = arith.addi %1, %c2_i32_15 : i32
    %c0_16 = arith.constant 0 : index
    %28 = arith.index_cast %27 : i32 to index
    %c4_17 = arith.constant 4 : index
    %c0_18 = arith.constant 0 : index
    %29 = vector.load %arg2[%c0_16, %28, %c4_17, %c0_18] : memref<1x20x20x4xf32, #tpu.memory_space<vmem>>, vector<1x8x16x4xf32>
    %30 = vector.shape_cast %29 : vector<1x8x16x4xf32> to vector<8x16x4xf32>
    %31 = vector.shape_cast %30 : vector<8x16x4xf32> to vector<128x4xf32>
    %c4_i32 = arith.constant 4 : i32
    %32 = arith.addi %1, %c4_i32 : i32
    %c0_19 = arith.constant 0 : index
    %33 = arith.index_cast %32 : i32 to index
    %c0_20 = arith.constant 0 : index
    %c0_21 = arith.constant 0 : index
    %34 = vector.load %arg2[%c0_19, %33, %c0_20, %c0_21] : memref<1x20x20x4xf32, #tpu.memory_space<vmem>>, vector<1x8x16x4xf32>
    %35 = vector.shape_cast %34 : vector<1x8x16x4xf32> to vector<8x16x4xf32>
    %36 = vector.shape_cast %35 : vector<8x16x4xf32> to vector<128x4xf32>
    %c4_i32_22 = arith.constant 4 : i32
    %37 = arith.addi %1, %c4_i32_22 : i32
    %c0_23 = arith.constant 0 : index
    %38 = arith.index_cast %37 : i32 to index
    %c2_24 = arith.constant 2 : index
    %c0_25 = arith.constant 0 : index
    %39 = vector.load %arg2[%c0_23, %38, %c2_24, %c0_25] : memref<1x20x20x4xf32, #tpu.memory_space<vmem>>, vector<1x8x16x4xf32>
    %40 = vector.shape_cast %39 : vector<1x8x16x4xf32> to vector<8x16x4xf32>
    %41 = vector.shape_cast %40 : vector<8x16x4xf32> to vector<128x4xf32>
    %c4_i32_26 = arith.constant 4 : i32
    %42 = arith.addi %1, %c4_i32_26 : i32
    %c0_27 = arith.constant 0 : index
    %43 = arith.index_cast %42 : i32 to index
    %c4_28 = arith.constant 4 : index
    %c0_29 = arith.constant 0 : index
    %44 = vector.load %arg2[%c0_27, %43, %c4_28, %c0_29] : memref<1x20x20x4xf32, #tpu.memory_space<vmem>>, vector<1x8x16x4xf32>
    %45 = vector.shape_cast %44 : vector<1x8x16x4xf32> to vector<8x16x4xf32>
    %46 = vector.shape_cast %45 : vector<8x16x4xf32> to vector<128x4xf32>
    %47 = tpu.concatenate %6, %11, %16, %21, %26, %31, %36, %41, %46 in 1 : vector<128x4xf32>, vector<128x4xf32>, vector<128x4xf32>, vector<128x4xf32>, vector<128x4xf32>, vector<128x4xf32>, vector<128x4xf32>, vector<128x4xf32>, vector<128x4xf32> -> vector<128x36xf32>
    %c0_30 = arith.constant 0 : index
    %c0_31 = arith.constant 0 : index
    %48 = vector.load %arg3[%c0_30, %c0_31] : memref<36x128xf32, #tpu.memory_space<vmem>>, vector<36x128xf32>
    %cst = arith.constant dense<0.000000e+00> : vector<128x128xf32>
    %49 = tpu.matmul %47, %48, %cst {dimension_numbers = #tpu.dot_dimension_numbers<[1], [0], [0], [1], [0, 0, 1, 1], [], []>} : vector<128x36xf32>, vector<36x128xf32>, vector<128x128xf32> -> vector<128x128xf32>
    %50 = vector.shape_cast %49 : vector<128x128xf32> to vector<8x16x128xf32>
    %c0_32 = arith.constant 0 : index
    %c0_33 = arith.constant 0 : index
    %c0_34 = arith.constant 0 : index
    %c0_35 = arith.constant 0 : index
    %51 = vector.load %arg4[%c0_32, %c0_33, %c0_34, %c0_35] : memref<1x8x16x128xf32, #tpu.memory_space<vmem>>, vector<1x8x16x128xf32>
    %52 = vector.shape_cast %51 : vector<1x8x16x128xf32> to vector<8x16x128xf32>
    %53 = vector.shape_cast %50 : vector<8x16x128xf32> to vector<1x8x16x128xf32>
    tpu.vector_store %arg4[%c0_32, %c0_33, %c0_34, %c0_35], %53 {strides = array<i32>} : memref<1x8x16x128xf32, #tpu.memory_space<vmem>>, vector<1x8x16x128xf32>,
    return
  }
  func.func @transform_0(%arg0: i32, %arg1: i32) -> (i32, i32, i32, i32) {
    %c0_i32 = arith.constant 0 : i32
    %c0_i32_0 = arith.constant 0 : i32
    %c0_i32_1 = arith.constant 0 : i32
    %c0_i32_2 = arith.constant 0 : i32
    return %arg0, %c0_i32, %c0_i32_0, %c0_i32_1 : i32, i32, i32, i32
  }
  func.func @transform_1(%arg0: i32, %arg1: i32) -> (i32, i32) {
    %c0_i32 = arith.constant 0 : i32
    %c0_i32_0 = arith.constant 0 : i32
    %c0_i32_1 = arith.constant 0 : i32
    return %c0_i32, %c0_i32_0 : i32, i32
  }
  func.func @transform_2(%arg0: i32, %arg1: i32) -> (i32, i32, i32, i32) {
    %c0_i32 = arith.constant 0 : i32
    %c0_i32_0 = arith.constant 0 : i32
    %c0_i32_1 = arith.constant 0 : i32
    return %arg0, %arg1, %c0_i32, %c0_i32_0 : i32, i32, i32, i32
  }
}

</mosaic_0001>

<llo_original>
// kernel: tpu_custom_call.1
$region0: #{tpu_custom_call.1}
  #allocation0 [shape = 'u32[]', space=smem, size = 0x4, offset = 0x4, fixed_abs, tag = 'smem constant byte address 0x4 - core index']
  #allocation1 [shape = 'u32[144,128]{1,0:T(1,128)}', space=vmem, size = 0x12000, scoped, tag = 'internal scratch']
  %s0 = inlined_call_operand.vmem [shape: f32[2,20,20,4], index: 0, kind: input, shape index: {}]
  %s1 = inlined_call_operand.vmem [shape: f32[36,128], index: 1, kind: input, shape index: {}]
  %s2 = inlined_call_operand.hbm [shape: f32[2,16,16,128], index: 2, kind: output, shape index: {}]
  %s3 = sld [smem:[#allocation0]]
  $region41: #{tpu_custom_call.1} parent=0
    _
  %s5 = ssub.s32 1, %s3
  %s6 = scalar_select 0, %s5, %s3
  $region1: #{tpu_custom_call.1} parent=0
    #allocation2 [shape = 'u8[131072]{0}', space=vmem, size = 0x20000, scoped, tag = 'output window, operand 0']
    #allocation3 [shape = 's32[2]{0}', space=sflag, size = 0x8, scoped, tag = 'scoped memory for tpu_custom_call.1']
    %7 = vsyncpa [#allocation3], 0
    %s8 = scalar_lea.sflag [#allocation3], 1
    %9 = vsyncpa %s8, 0
    loop: start=0, step=1, limit=6
    $region2: #{tpu_custom_call.1} parent=1 // loop_pre_header
      _
    $region3: #{tpu_custom_call.1} parent=1 // loop_header
      %s11 = sphi 0, %s15
      %p12 = scmp.ge.s32.totalorder %s11, 6
      %s18 = sphi 0, %s30
      %s19 = sphi 0, %s26
      %s20 = sphi 0, %s18
      %s21 = sphi 0, %s19
      %s22 = sphi 0, %s20
      %s23 = sphi 0, %s21
      %s33 = sphi 0, %s35
      %s36 = sphi 0, %s33
      %s37 = sphi 0, %s36
      %s53 = sphi 0, %s37
      %s57 = sphi 0, %s57
      %s59 = sphi 0, %s57
      %s60 = sphi 0, %s59
      %s74 = sphi 0, %s60
      %s82 = sphi 0, %s84
      %s85 = sphi 0, %s82
      %s86 = sphi 0, %s85
      %s102 = sphi 0, %s86
    $region4: #{tpu_custom_call.1} parent=1 // loop_header_branch
      %14 = sbr.rel (%p12) target = $region8
    $region5: #{tpu_custom_call.1} parent=1 // loop_body
      %s16 = ssub.s32 %s11, 1
      %s17 = ssub.s32 %s11, 2
      %s24 = sadd.s32 1, %s19
      %p25 = scmp.ge.s32.totalorder %s24, 2
      %s26 = scalar_select %p25, 0, %s24
      %s27 = sadd.s32 1, %s18
      %s28 = scalar_select %p25, %s27, %s18
      %p29 = scmp.ge.s32.totalorder %s28, 2
      %s30 = scalar_select %p29, 0, %s28
      %s31 = ssub.s32 %s18, %s30
      %p32 = scmp.eq.s32.totalorder %s31, 0
      %s34 = sadd.s32 %s33, 1
      %s35 = scalar_select %p32, %s33, %s34
      %p38 = pneg %p32
      %p39 = scmp.eq.s32.totalorder %s11, 3
      %p40 = por %p38, %p39
      %p41 = scmp.ne.s32.totalorder %s33, %s36
      %p42 = scmp.eq.s32.totalorder %s11, 0
      %p43 = por %p41, %p42
      %p44 = scmp.ne.s32.totalorder %s33, %s36
      %p45 = scmp.eq.s32.totalorder %s16, 3
      %p46 = por %p44, %p45
      %p47 = scmp.ne.s32.totalorder %s36, %s37
      %p48 = scmp.eq.s32.totalorder %s16, 0
      %p49 = por %p47, %p48
      %p50 = scmp.ne.s32.totalorder %s36, %s37
      %p51 = scmp.eq.s32.totalorder %s17, 3
      %p52 = por %p50, %p51
      %p54 = scmp.ne.s32.totalorder %s37, %s53
      %p55 = scmp.eq.s32.totalorder %s17, 0
      %p56 = por %p54, %p55
      %s58 = sadd.s32 %s57, 1
      %p61 = scmp.eq.s32.totalorder %s11, 3
      %p62 = scmp.ne.s32.totalorder %s57, %s59
      %p63 = scmp.eq.s32.totalorder %s11, 0
      %p64 = por %p62, %p63
      %p65 = scmp.ne.s32.totalorder %s57, %s59
      %p66 = scmp.eq.s32.totalorder %s16, 3
      %p67 = por %p65, %p66
      %p68 = scmp.ne.s32.totalorder %s59, %s60
      %p69 = scmp.eq.s32.totalorder %s16, 0
      %p70 = por %p68, %p69
      %p71 = scmp.ne.s32.totalorder %s59, %s60
      %p72 = scmp.eq.s32.totalorder %s17, 3
      %p73 = por %p71, %p72
      %p75 = scmp.ne.s32.totalorder %s60, %s74
      %p76 = scmp.eq.s32.totalorder %s17, 0
      %p77 = por %p75, %p76
      %s78 = ssub.s32 %s18, %s30
      %s79 = ssub.s32 %s19, %s26
      %s80 = sor.u32 %s78, %s79
      %p81 = scmp.eq.s32.totalorder %s80, 0
      %s83 = sadd.s32 %s82, 1
      %s84 = scalar_select %p81, %s82, %s83
      %p87 = pneg %p81
      %p88 = scmp.eq.s32.totalorder %s11, 3
      %p89 = por %p87, %p88
      %p90 = scmp.ne.s32.totalorder %s82, %s85
      %p91 = scmp.eq.s32.totalorder %s11, 0
      %p92 = por %p90, %p91
      %p93 = scmp.ne.s32.totalorder %s82, %s85
      %p94 = scmp.eq.s32.totalorder %s16, 3
      %p95 = por %p93, %p94
      %p96 = scmp.ne.s32.totalorder %s85, %s86
      %p97 = scmp.eq.s32.totalorder %s16, 0
      %p98 = por %p96, %p97
      %p99 = scmp.ne.s32.totalorder %s85, %s86
      %p100 = scmp.eq.s32.totalorder %s17, 3
      %p101 = por %p99, %p100
      %p103 = scmp.ne.s32.totalorder %s86, %s102
      %p104 = scmp.eq.s32.totalorder %s17, 0
      %p105 = por %p103, %p104
      %p106 = scmp.le.s32.totalorder 1, %s11
      %p107 = scmp.lt.s32.totalorder %s11, 5
      %p108 = pnand %p106, %p107
      %p109 = pneg %p108
      // Predicated region
      $region9: #{tpu_custom_call.1} parent=5 // pred_check
        _
      $region10: #{tpu_custom_call.1} parent=5 // pred_check_branch
        %111 = sbr.rel (%p108) target = $region12
      $region11: #{tpu_custom_call.1} parent=5 // pred_region
        %s112 = ssub.s32 %s11, 1
        // Predicated region
        $region13: #{tpu_custom_call.1} parent=11 // pred_check
          %p113 = pneg %p70
        $region14: #{tpu_custom_call.1} parent=11 // pred_check_branch
          %115 = sbr.rel (%p113) target = $region16
        $region15: #{tpu_custom_call.1} parent=11 // pred_region
          _
        $region16: #{tpu_custom_call.1} parent=11 // pred_fallthru
          _
      $region12: #{tpu_custom_call.1} parent=5 // pred_fallthru
        _
      %p116 = scmp.lt.s32.totalorder %s11, 4
      // Predicated region
      $region17: #{tpu_custom_call.1} parent=5 // pred_check
        %p117 = pneg %p116
      $region18: #{tpu_custom_call.1} parent=5 // pred_check_branch
        %119 = sbr.rel (%p117) target = $region20
      $region19: #{tpu_custom_call.1} parent=5 // pred_region
        // Predicated region
        $region21: #{tpu_custom_call.1} parent=19 // pred_check
          %p120 = pneg %p43
        $region22: #{tpu_custom_call.1} parent=19 // pred_check_branch
          %122 = sbr.rel (%p120) target = $region24
        $region23: #{tpu_custom_call.1} parent=19 // pred_region
          %p123 = scmp.lt.s32.totalorder %s18, 1
          %s124 = scalar_select %p123, %s18, 1
          %s125 = smul.addr %s124, 60
          %s126 = smul.addr %s125, 8
          %s127 = scalar_lea.vmem %s0, %s126
        $region24: #{tpu_custom_call.1} parent=19 // pred_fallthru
          _
      $region20: #{tpu_custom_call.1} parent=5 // pred_fallthru
        _
      %p128 = scmp.le.s32.totalorder 1, %s11
      %p129 = scmp.lt.s32.totalorder %s11, 5
      %p130 = pnand %p128, %p129
      %p131 = pneg %p130
      // Predicated region
      $region25: #{tpu_custom_call.1} parent=5 // pred_check
        _
      $region26: #{tpu_custom_call.1} parent=5 // pred_check_branch
        %133 = sbr.rel (%p130) target = $region28
      $region27: #{tpu_custom_call.1} parent=5 // pred_region
        %s134 = ssub.s32 %s11, 1
        %p135 = scmp.lt.s32.totalorder %s20, 1
        %s136 = scalar_select %p135, %s20, 1
        %s137 = smul.addr %s136, 60
        %s138 = smul.addr %s137, 8
        %s139 = scalar_lea.vmem %s0, %s138
        %p140 = pneg %p49
        %p141 = pneg %p46
        %p142 = pneg %p70
        %p143 = pneg %p67
        %p144 = pneg %p98
        %p145 = pneg %p95
        %s146 = sand.u32 %s85, 1
        %s147 = scalar_lea.sflag [#allocation3], %s146
        %s148 = sand.u32 %s85, 1
        %s149 = smul.addr %s148, 128
        %s150 = scalar_lea.vmem [#allocation2], %s149
        %p151 = scmp.lt.s32.totalorder %s20, 1
        %s152 = scalar_select %p151, %s20, 1
        %s153 = smul.addr %s152, 60
        %s154 = smul.addr %s153, 8
        %s155 = scalar_lea.vmem %s0, %s154
        %s156 = smul.u32 8, %s21
        %s157 = smul.u32 %s21, 8
        %s158 = smul.u32 %s157, 24
        %s159 = scalar_lea.vmem %s155, %s158
        %v160 = vld [vmem:[%s159] sm:$0xff]
        %v161 = vld [vmem:[%s159 + $0x8] sm:$0xff]
        %v162 = vld [vmem:[%s159 + $0x18] sm:$0xff]
        %v163 = vld [vmem:[%s159 + $0x20] sm:$0xff]
        %v164 = vld [vmem:[%s159 + $0x30] sm:$0xff]
        %v165 = vld [vmem:[%s159 + $0x38] sm:$0xff]
        %v166 = vld [vmem:[%s159 + $0x48] sm:$0xff]
        %v167 = vld [vmem:[%s159 + $0x50] sm:$0xff]
        %v168 = vld [vmem:[%s159 + $0x60] sm:$0xff]
        %v169 = vld [vmem:[%s159 + $0x68] sm:$0xff]
        %v170 = vld [vmem:[%s159 + $0x78] sm:$0xff]
        %v171 = vld [vmem:[%s159 + $0x80] sm:$0xff]
        %v172 = vld [vmem:[%s159 + $0x90] sm:$0xff]
        %v173 = vld [vmem:[%s159 + $0x98] sm:$0xff]
        %v174 = vld [vmem:[%s159 + $0xa8] sm:$0xff]
        %v175 = vld [vmem:[%s159 + $0xb0] sm:$0xff]
        %v176 = vld [vmem:[%s159 + $0x2] sm:$0xff]
        %v177 = vld [vmem:[%s159 + $0xa] sm:$0xff]
        %v178 = vld [vmem:[%s159 + $0x1a] sm:$0xff]
        %v179 = vld [vmem:[%s159 + $0x22] sm:$0xff]
        %v180 = vld [vmem:[%s159 + $0x32] sm:$0xff]
        %v181 = vld [vmem:[%s159 + $0x3a] sm:$0xff]
        %v182 = vld [vmem:[%s159 + $0x4a] sm:$0xff]
        %v183 = vld [vmem:[%s159 + $0x52] sm:$0xff]
        %v184 = vld [vmem:[%s159 + $0x62] sm:$0xff]
        %v185 = vld [vmem:[%s159 + $0x6a] sm:$0xff]
        %v186 = vld [vmem:[%s159 + $0x7a] sm:$0xff]
        %v187 = vld [vmem:[%s159 + $0x82] sm:$0xff]
        %v188 = vld [vmem:[%s159 + $0x92] sm:$0xff]
        %v189 = vld [vmem:[%s159 + $0x9a] sm:$0xff]
        %v190 = vld [vmem:[%s159 + $0xaa] sm:$0xff]
        %v191 = vld [vmem:[%s159 + $0xb2] sm:$0xff]
        %v192 = vld [vmem:[%s159 + $0x4] sm:$0xff]
        %v193 = vld [vmem:[%s159 + $0xc] sm:$0xff]
        %v194 = vld [vmem:[%s159 + $0x1c] sm:$0xff]
        %v195 = vld [vmem:[%s159 + $0x24] sm:$0xff]
        %v196 = vld [vmem:[%s159 + $0x34] sm:$0xff]
        %v197 = vld [vmem:[%s159 + $0x3c] sm:$0xff]
        %v198 = vld [vmem:[%s159 + $0x4c] sm:$0xff]
        %v199 = vld [vmem:[%s159 + $0x54] sm:$0xff]
        %v200 = vld [vmem:[%s159 + $0x64] sm:$0xff]
        %v201 = vld [vmem:[%s159 + $0x6c] sm:$0xff]
        %v202 = vld [vmem:[%s159 + $0x7c] sm:$0xff]
        %v203 = vld [vmem:[%s159 + $0x84] sm:$0xff]
        %v204 = vld [vmem:[%s159 + $0x94] sm:$0xff]
        %v205 = vld [vmem:[%s159 + $0x9c] sm:$0xff]
        %v206 = vld [vmem:[%s159 + $0xac] sm:$0xff]
        %v207 = vld [vmem:[%s159 + $0xb4] sm:$0xff]
        %s208 = sadd.s32 %s157, 2
        %s209 = smul.u32 %s208, 24
        %s210 = scalar_lea.vmem %s155, %s209
        %v211 = vld [vmem:[%s210] sm:$0xff]
        %v212 = vld [vmem:[%s210 + $0x8] sm:$0xff]
        %v213 = vld [vmem:[%s210 + $0x18] sm:$0xff]
        %v214 = vld [vmem:[%s210 + $0x20] sm:$0xff]
        %v215 = vld [vmem:[%s210 + $0x30] sm:$0xff]
        %v216 = vld [vmem:[%s210 + $0x38] sm:$0xff]
        %v217 = vld [vmem:[%s210 + $0x48] sm:$0xff]
        %v218 = vld [vmem:[%s210 + $0x50] sm:$0xff]
        %v219 = vld [vmem:[%s210 + $0x60] sm:$0xff]
        %v220 = vld [vmem:[%s210 + $0x68] sm:$0xff]
        %v221 = vld [vmem:[%s210 + $0x78] sm:$0xff]
        %v222 = vld [vmem:[%s210 + $0x80] sm:$0xff]
        %v223 = vld [vmem:[%s210 + $0x90] sm:$0xff]
        %v224 = vld [vmem:[%s210 + $0x98] sm:$0xff]
        %v225 = vld [vmem:[%s210 + $0xa8] sm:$0xff]
        %v226 = vld [vmem:[%s210 + $0xb0] sm:$0xff]
        %v227 = vld [vmem:[%s210 + $0x2] sm:$0xff]
        %v228 = vld [vmem:[%s210 + $0xa] sm:$0xff]
        %v229 = vld [vmem:[%s210 + $0x1a] sm:$0xff]
        %v230 = vld [vmem:[%s210 + $0x22] sm:$0xff]
        %v231 = vld [vmem:[%s210 + $0x32] sm:$0xff]
        %v232 = vld [vmem:[%s210 + $0x3a] sm:$0xff]
        %v233 = vld [vmem:[%s210 + $0x4a] sm:$0xff]
        %v234 = vld [vmem:[%s210 + $0x52] sm:$0xff]
        %v235 = vld [vmem:[%s210 + $0x62] sm:$0xff]
        %v236 = vld [vmem:[%s210 + $0x6a] sm:$0xff]
        %v237 = vld [vmem:[%s210 + $0x7a] sm:$0xff]
        %v238 = vld [vmem:[%s210 + $0x82] sm:$0xff]
        %v239 = vld [vmem:[%s210 + $0x92] sm:$0xff]
        %v240 = vld [vmem:[%s210 + $0x9a] sm:$0xff]
        %v241 = vld [vmem:[%s210 + $0xaa] sm:$0xff]
        %v242 = vld [vmem:[%s210 + $0xb2] sm:$0xff]
        %v243 = vld [vmem:[%s210 + $0x4] sm:$0xff]
        %v244 = vld [vmem:[%s210 + $0xc] sm:$0xff]
        %v245 = vld [vmem:[%s210 + $0x1c] sm:$0xff]
        %v246 = vld [vmem:[%s210 + $0x24] sm:$0xff]
        %v247 = vld [vmem:[%s210 + $0x34] sm:$0xff]
        %v248 = vld [vmem:[%s210 + $0x3c] sm:$0xff]
        %v249 = vld [vmem:[%s210 + $0x4c] sm:$0xff]
        %v250 = vld [vmem:[%s210 + $0x54] sm:$0xff]
        %v251 = vld [vmem:[%s210 + $0x64] sm:$0xff]
        %v252 = vld [vmem:[%s210 + $0x6c] sm:$0xff]
        %v253 = vld [vmem:[%s210 + $0x7c] sm:$0xff]
        %v254 = vld [vmem:[%s210 + $0x84] sm:$0xff]
        %v255 = vld [vmem:[%s210 + $0x94] sm:$0xff]
        %v256 = vld [vmem:[%s210 + $0x9c] sm:$0xff]
        %v257 = vld [vmem:[%s210 + $0xac] sm:$0xff]
        %v258 = vld [vmem:[%s210 + $0xb4] sm:$0xff]
        %s259 = sadd.s32 %s157, 4
        %s260 = smul.u32 %s259, 24
        %s261 = scalar_lea.vmem %s155, %s260
        %v262 = vld [vmem:[%s261] sm:$0xff]
        %v263 = vld [vmem:[%s261 + $0x8] sm:$0xff]
        %v264 = vld [vmem:[%s261 + $0x18] sm:$0xff]
        %v265 = vld [vmem:[%s261 + $0x20] sm:$0xff]
        %v266 = vld [vmem:[%s261 + $0x30] sm:$0xff]
        %v267 = vld [vmem:[%s261 + $0x38] sm:$0xff]
        %v268 = vld [vmem:[%s261 + $0x48] sm:$0xff]
        %v269 = vld [vmem:[%s261 + $0x50] sm:$0xff]
        %v270 = vld [vmem:[%s261 + $0x60] sm:$0xff]
        %v271 = vld [vmem:[%s261 + $0x68] sm:$0xff]
        %v272 = vld [vmem:[%s261 + $0x78] sm:$0xff]
        %v273 = vld [vmem:[%s261 + $0x80] sm:$0xff]
        %v274 = vld [vmem:[%s261 + $0x90] sm:$0xff]
        %v275 = vld [vmem:[%s261 + $0x98] sm:$0xff]
        %v276 = vld [vmem:[%s261 + $0xa8] sm:$0xff]
        %v277 = vld [vmem:[%s261 + $0xb0] sm:$0xff]
        %v278 = vld [vmem:[%s261 + $0x2] sm:$0xff]
        %v279 = vld [vmem:[%s261 + $0xa] sm:$0xff]
        %v280 = vld [vmem:[%s261 + $0x1a] sm:$0xff]
        %v281 = vld [vmem:[%s261 + $0x22] sm:$0xff]
        %v282 = vld [vmem:[%s261 + $0x32] sm:$0xff]
        %v283 = vld [vmem:[%s261 + $0x3a] sm:$0xff]
        %v284 = vld [vmem:[%s261 + $0x4a] sm:$0xff]
        %v285 = vld [vmem:[%s261 + $0x52] sm:$0xff]
        %v286 = vld [vmem:[%s261 + $0x62] sm:$0xff]
        %v287 = vld [vmem:[%s261 + $0x6a] sm:$0xff]
        %v288 = vld [vmem:[%s261 + $0x7a] sm:$0xff]
        %v289 = vld [vmem:[%s261 + $0x82] sm:$0xff]
        %v290 = vld [vmem:[%s261 + $0x92] sm:$0xff]
        %v291 = vld [vmem:[%s261 + $0x9a] sm:$0xff]
        %v292 = vld [vmem:[%s261 + $0xaa] sm:$0xff]
        %v293 = vld [vmem:[%s261 + $0xb2] sm:$0xff]
        %v294 = vld [vmem:[%s261 + $0x4] sm:$0xff]
        %v295 = vld [vmem:[%s261 + $0xc] sm:$0xff]
        %v296 = vld [vmem:[%s261 + $0x1c] sm:$0xff]
        %v297 = vld [vmem:[%s261 + $0x24] sm:$0xff]
        %v298 = vld [vmem:[%s261 + $0x34] sm:$0xff]
        %v299 = vld [vmem:[%s261 + $0x3c] sm:$0xff]
        %v300 = vld [vmem:[%s261 + $0x4c] sm:$0xff]
        %v301 = vld [vmem:[%s261 + $0x54] sm:$0xff]
        %v302 = vld [vmem:[%s261 + $0x64] sm:$0xff]
        %v303 = vld [vmem:[%s261 + $0x6c] sm:$0xff]
        %v304 = vld [vmem:[%s261 + $0x7c] sm:$0xff]
        %v305 = vld [vmem:[%s261 + $0x84] sm:$0xff]
        %v306 = vld [vmem:[%s261 + $0x94] sm:$0xff]
        %v307 = vld [vmem:[%s261 + $0x9c] sm:$0xff]
        %v308 = vld [vmem:[%s261 + $0xac] sm:$0xff]
        %v309 = vld [vmem:[%s261 + $0xb4] sm:$0xff]
        %326 = vrot.lane.b32.xlu0 %v176, 4
        %v327 = vpop.permute.xlu0 %326
        %328 = vrot.lane.b32.xlu0 %v177, 4
        %v329 = vpop.permute.xlu0 %328
        %330 = vrot.lane.b32.xlu0 %v178, 4
        %v331 = vpop.permute.xlu0 %330
        %332 = vrot.lane.b32.xlu0 %v179, 4
        %v333 = vpop.permute.xlu0 %332
        %334 = vrot.lane.b32.xlu0 %v180, 4
        %v335 = vpop.permute.xlu0 %334
        %336 = vrot.lane.b32.xlu0 %v181, 4
        %v337 = vpop.permute.xlu0 %336
        %338 = vrot.lane.b32.xlu0 %v182, 4
        %v339 = vpop.permute.xlu0 %338
        %340 = vrot.lane.b32.xlu0 %v183, 4
        %v341 = vpop.permute.xlu0 %340
        %342 = vrot.lane.b32.xlu0 %v184, 4
        %v343 = vpop.permute.xlu0 %342
        %344 = vrot.lane.b32.xlu0 %v185, 4
        %v345 = vpop.permute.xlu0 %344
        %346 = vrot.lane.b32.xlu0 %v186, 4
        %v347 = vpop.permute.xlu0 %346
        %348 = vrot.lane.b32.xlu0 %v187, 4
        %v349 = vpop.permute.xlu0 %348
        %350 = vrot.lane.b32.xlu0 %v188, 4
        %v351 = vpop.permute.xlu0 %350
        %352 = vrot.lane.b32.xlu0 %v189, 4
        %v353 = vpop.permute.xlu0 %352
        %354 = vrot.lane.b32.xlu0 %v190, 4
        %v355 = vpop.permute.xlu0 %354
        %356 = vrot.lane.b32.xlu0 %v191, 4
        %v357 = vpop.permute.xlu0 %356
        %390 = vrot.lane.b32.xlu0 %v192, 8
        %v391 = vpop.permute.xlu0 %390
        %392 = vrot.lane.b32.xlu0 %v193, 8
        %v393 = vpop.permute.xlu0 %392
        %394 = vrot.lane.b32.xlu0 %v194, 8
        %v395 = vpop.permute.xlu0 %394
        %396 = vrot.lane.b32.xlu0 %v195, 8
        %v397 = vpop.permute.xlu0 %396
        %398 = vrot.lane.b32.xlu0 %v196, 8
        %v399 = vpop.permute.xlu0 %398
        %400 = vrot.lane.b32.xlu0 %v197, 8
        %v401 = vpop.permute.xlu0 %400
        %402 = vrot.lane.b32.xlu0 %v198, 8
        %v403 = vpop.permute.xlu0 %402
        %404 = vrot.lane.b32.xlu0 %v199, 8
        %v405 = vpop.permute.xlu0 %404
        %406 = vrot.lane.b32.xlu0 %v200, 8
        %v407 = vpop.permute.xlu0 %406
        %408 = vrot.lane.b32.xlu0 %v201, 8
        %v409 = vpop.permute.xlu0 %408
        %410 = vrot.lane.b32.xlu0 %v202, 8
        %v411 = vpop.permute.xlu0 %410
        %412 = vrot.lane.b32.xlu0 %v203, 8
        %v413 = vpop.permute.xlu0 %412
        %414 = vrot.lane.b32.xlu0 %v204, 8
        %v415 = vpop.permute.xlu0 %414
        %416 = vrot.lane.b32.xlu0 %v205, 8
        %v417 = vpop.permute.xlu0 %416
        %418 = vrot.lane.b32.xlu0 %v206, 8
        %v419 = vpop.permute.xlu0 %418
        %420 = vrot.lane.b32.xlu0 %v207, 8
        %v421 = vpop.permute.xlu0 %420
        %454 = vrot.lane.b32.xlu0 %v211, 12
        %v455 = vpop.permute.xlu0 %454
        %456 = vrot.lane.b32.xlu0 %v212, 12
        %v457 = vpop.permute.xlu0 %456
        %458 = vrot.lane.b32.xlu0 %v213, 12
        %v459 = vpop.permute.xlu0 %458
        %460 = vrot.lane.b32.xlu0 %v214, 12
        %v461 = vpop.permute.xlu0 %460
        %462 = vrot.lane.b32.xlu0 %v215, 12
        %v463 = vpop.permute.xlu0 %462
        %464 = vrot.lane.b32.xlu0 %v216, 12
        %v465 = vpop.permute.xlu0 %464
        %466 = vrot.lane.b32.xlu0 %v217, 12
        %v467 = vpop.permute.xlu0 %466
        %468 = vrot.lane.b32.xlu0 %v218, 12
        %v469 = vpop.permute.xlu0 %468
        %470 = vrot.lane.b32.xlu0 %v219, 12
        %v471 = vpop.permute.xlu0 %470
        %472 = vrot.lane.b32.xlu0 %v220, 12
        %v473 = vpop.permute.xlu0 %472
        %474 = vrot.lane.b32.xlu0 %v221, 12
        %v475 = vpop.permute.xlu0 %474
        %476 = vrot.lane.b32.xlu0 %v222, 12
        %v477 = vpop.permute.xlu0 %476
        %478 = vrot.lane.b32.xlu0 %v223, 12
        %v479 = vpop.permute.xlu0 %478
        %480 = vrot.lane.b32.xlu0 %v224, 12
        %v481 = vpop.permute.xlu0 %480
        %482 = vrot.lane.b32.xlu0 %v225, 12
        %v483 = vpop.permute.xlu0 %482
        %484 = vrot.lane.b32.xlu0 %v226, 12
        %v485 = vpop.permute.xlu0 %484
        %518 = vrot.lane.b32.xlu0 %v227, 16
        %v519 = vpop.permute.xlu0 %518
        %520 = vrot.lane.b32.xlu0 %v228, 16
        %v521 = vpop.permute.xlu0 %520
        %522 = vrot.lane.b32.xlu0 %v229, 16
        %v523 = vpop.permute.xlu0 %522
        %524 = vrot.lane.b32.xlu0 %v230, 16
        %v525 = vpop.permute.xlu0 %524
        %526 = vrot.lane.b32.xlu0 %v231, 16
        %v527 = vpop.permute.xlu0 %526
        %528 = vrot.lane.b32.xlu0 %v232, 16
        %v529 = vpop.permute.xlu0 %528
        %530 = vrot.lane.b32.xlu0 %v233, 16
        %v531 = vpop.permute.xlu0 %530
        %532 = vrot.lane.b32.xlu0 %v234, 16
        %v533 = vpop.permute.xlu0 %532
        %534 = vrot.lane.b32.xlu0 %v235, 16
        %v535 = vpop.permute.xlu0 %534
        %536 = vrot.lane.b32.xlu0 %v236, 16
        %v537 = vpop.permute.xlu0 %536
        %538 = vrot.lane.b32.xlu0 %v237, 16
        %v539 = vpop.permute.xlu0 %538
        %540 = vrot.lane.b32.xlu0 %v238, 16
        %v541 = vpop.permute.xlu0 %540
        %542 = vrot.lane.b32.xlu0 %v239, 16
        %v543 = vpop.permute.xlu0 %542
        %544 = vrot.lane.b32.xlu0 %v240, 16
        %v545 = vpop.permute.xlu0 %544
        %546 = vrot.lane.b32.xlu0 %v241, 16
        %v547 = vpop.permute.xlu0 %546
        %548 = vrot.lane.b32.xlu0 %v242, 16
        %v549 = vpop.permute.xlu0 %548
        %582 = vrot.lane.b32.xlu0 %v243, 20
        %v583 = vpop.permute.xlu0 %582
        %584 = vrot.lane.b32.xlu0 %v244, 20
        %v585 = vpop.permute.xlu0 %584
        %586 = vrot.lane.b32.xlu0 %v245, 20
        %v587 = vpop.permute.xlu0 %586
        %588 = vrot.lane.b32.xlu0 %v246, 20
        %v589 = vpop.permute.xlu0 %588
        %590 = vrot.lane.b32.xlu0 %v247, 20
        %v591 = vpop.permute.xlu0 %590
        %592 = vrot.lane.b32.xlu0 %v248, 20
        %v593 = vpop.permute.xlu0 %592
        %594 = vrot.lane.b32.xlu0 %v249, 20
        %v595 = vpop.permute.xlu0 %594
        %596 = vrot.lane.b32.xlu0 %v250, 20
        %v597 = vpop.permute.xlu0 %596
        %598 = vrot.lane.b32.xlu0 %v251, 20
        %v599 = vpop.permute.xlu0 %598
        %600 = vrot.lane.b32.xlu0 %v252, 20
        %v601 = vpop.permute.xlu0 %600
        %602 = vrot.lane.b32.xlu0 %v253, 20
        %v603 = vpop.permute.xlu0 %602
        %604 = vrot.lane.b32.xlu0 %v254, 20
        %v605 = vpop.permute.xlu0 %604
        %606 = vrot.lane.b32.xlu0 %v255, 20
        %v607 = vpop.permute.xlu0 %606
        %608 = vrot.lane.b32.xlu0 %v256, 20
        %v609 = vpop.permute.xlu0 %608
        %610 = vrot.lane.b32.xlu0 %v257, 20
        %v611 = vpop.permute.xlu0 %610
        %612 = vrot.lane.b32.xlu0 %v258, 20
        %v613 = vpop.permute.xlu0 %612
        %646 = vrot.lane.b32.xlu0 %v262, 24
        %v647 = vpop.permute.xlu0 %646
        %648 = vrot.lane.b32.xlu0 %v263, 24
        %v649 = vpop.permute.xlu0 %648
        %650 = vrot.lane.b32.xlu0 %v264, 24
        %v651 = vpop.permute.xlu0 %650
        %652 = vrot.lane.b32.xlu0 %v265, 24
        %v653 = vpop.permute.xlu0 %652
        %654 = vrot.lane.b32.xlu0 %v266, 24
        %v655 = vpop.permute.xlu0 %654
        %656 = vrot.lane.b32.xlu0 %v267, 24
        %v657 = vpop.permute.xlu0 %656
        %658 = vrot.lane.b32.xlu0 %v268, 24
        %v659 = vpop.permute.xlu0 %658
        %660 = vrot.lane.b32.xlu0 %v269, 24
        %v661 = vpop.permute.xlu0 %660
        %662 = vrot.lane.b32.xlu0 %v270, 24
        %v663 = vpop.permute.xlu0 %662
        %664 = vrot.lane.b32.xlu0 %v271, 24
        %v665 = vpop.permute.xlu0 %664
        %666 = vrot.lane.b32.xlu0 %v272, 24
        %v667 = vpop.permute.xlu0 %666
        %668 = vrot.lane.b32.xlu0 %v273, 24
        %v669 = vpop.permute.xlu0 %668
        %670 = vrot.lane.b32.xlu0 %v274, 24
        %v671 = vpop.permute.xlu0 %670
        %672 = vrot.lane.b32.xlu0 %v275, 24
        %v673 = vpop.permute.xlu0 %672
        %674 = vrot.lane.b32.xlu0 %v276, 24
        %v675 = vpop.permute.xlu0 %674
        %676 = vrot.lane.b32.xlu0 %v277, 24
        %v677 = vpop.permute.xlu0 %676
        %710 = vrot.lane.b32.xlu0 %v278, 28
        %v711 = vpop.permute.xlu0 %710
        %712 = vrot.lane.b32.xlu0 %v279, 28
        %v713 = vpop.permute.xlu0 %712
        %714 = vrot.lane.b32.xlu0 %v280, 28
        %v715 = vpop.permute.xlu0 %714
        %716 = vrot.lane.b32.xlu0 %v281, 28
        %v717 = vpop.permute.xlu0 %716
        %718 = vrot.lane.b32.xlu0 %v282, 28
        %v719 = vpop.permute.xlu0 %718
        %720 = vrot.lane.b32.xlu0 %v283, 28
        %v721 = vpop.permute.xlu0 %720
        %722 = vrot.lane.b32.xlu0 %v284, 28
        %v723 = vpop.permute.xlu0 %722
        %724 = vrot.lane.b32.xlu0 %v285, 28
        %v725 = vpop.permute.xlu0 %724
        %726 = vrot.lane.b32.xlu0 %v286, 28
        %v727 = vpop.permute.xlu0 %726
        %728 = vrot.lane.b32.xlu0 %v287, 28
        %v729 = vpop.permute.xlu0 %728
        %730 = vrot.lane.b32.xlu0 %v288, 28
        %v731 = vpop.permute.xlu0 %730
        %732 = vrot.lane.b32.xlu0 %v289, 28
        %v733 = vpop.permute.xlu0 %732
        %734 = vrot.lane.b32.xlu0 %v290, 28
        %v735 = vpop.permute.xlu0 %734
        %736 = vrot.lane.b32.xlu0 %v291, 28
        %v737 = vpop.permute.xlu0 %736
        %738 = vrot.lane.b32.xlu0 %v292, 28
        %v739 = vpop.permute.xlu0 %738
        %740 = vrot.lane.b32.xlu0 %v293, 28
        %v741 = vpop.permute.xlu0 %740
        %774 = vrot.lane.b32.xlu0 %v294, 32
        %v775 = vpop.permute.xlu0 %774
        %776 = vrot.lane.b32.xlu0 %v295, 32
        %v777 = vpop.permute.xlu0 %776
        %778 = vrot.lane.b32.xlu0 %v296, 32
        %v779 = vpop.permute.xlu0 %778
        %780 = vrot.lane.b32.xlu0 %v297, 32
        %v781 = vpop.permute.xlu0 %780
        %782 = vrot.lane.b32.xlu0 %v298, 32
        %v783 = vpop.permute.xlu0 %782
        %784 = vrot.lane.b32.xlu0 %v299, 32
        %v785 = vpop.permute.xlu0 %784
        %786 = vrot.lane.b32.xlu0 %v300, 32
        %v787 = vpop.permute.xlu0 %786
        %788 = vrot.lane.b32.xlu0 %v301, 32
        %v789 = vpop.permute.xlu0 %788
        %790 = vrot.lane.b32.xlu0 %v302, 32
        %v791 = vpop.permute.xlu0 %790
        %792 = vrot.lane.b32.xlu0 %v303, 32
        %v793 = vpop.permute.xlu0 %792
        %794 = vrot.lane.b32.xlu0 %v304, 32
        %v795 = vpop.permute.xlu0 %794
        %796 = vrot.lane.b32.xlu0 %v305, 32
        %v797 = vpop.permute.xlu0 %796
        %798 = vrot.lane.b32.xlu0 %v306, 32
        %v799 = vpop.permute.xlu0 %798
        %800 = vrot.lane.b32.xlu0 %v307, 32
        %v801 = vpop.permute.xlu0 %800
        %802 = vrot.lane.b32.xlu0 %v308, 32
        %v803 = vpop.permute.xlu0 %802
        %804 = vrot.lane.b32.xlu0 %v309, 32
        %v805 = vpop.permute.xlu0 %804
        %vm822 = vcmask 31744
        %v823 = vsel %vm822, %v160, %v327
        %v824 = vsel %vm822, %v161, %v329
        %v825 = vsel %vm822, %v162, %v331
        %v826 = vsel %vm822, %v163, %v333
        %v827 = vsel %vm822, %v164, %v335
        %v828 = vsel %vm822, %v165, %v337
        %v829 = vsel %vm822, %v166, %v339
        %v830 = vsel %vm822, %v167, %v341
        %v831 = vsel %vm822, %v168, %v343
        %v832 = vsel %vm822, %v169, %v345
        %v833 = vsel %vm822, %v170, %v347
        %v834 = vsel %vm822, %v171, %v349
        %v835 = vsel %vm822, %v172, %v351
        %v836 = vsel %vm822, %v173, %v353
        %v837 = vsel %vm822, %v174, %v355
        %v838 = vsel %vm822, %v175, %v357
        %vm839 = vcmask 64512
        %v840 = vsel %vm839, %v823, %v391
        %v841 = vsel %vm839, %v824, %v393
        %v842 = vsel %vm839, %v825, %v395
        %v843 = vsel %vm839, %v826, %v397
        %v844 = vsel %vm839, %v827, %v399
        %v845 = vsel %vm839, %v828, %v401
        %v846 = vsel %vm839, %v829, %v403
        %v847 = vsel %vm839, %v830, %v405
        %v848 = vsel %vm839, %v831, %v407
        %v849 = vsel %vm839, %v832, %v409
        %v850 = vsel %vm839, %v833, %v411
        %v851 = vsel %vm839, %v834, %v413
        %v852 = vsel %vm839, %v835, %v415
        %v853 = vsel %vm839, %v836, %v417
        %v854 = vsel %vm839, %v837, %v419
        %v855 = vsel %vm839, %v838, %v421
        %vm856 = vcmask 97280
        %v857 = vsel %vm856, %v840, %v455
        %v858 = vsel %vm856, %v841, %v457
        %v859 = vsel %vm856, %v842, %v459
        %v860 = vsel %vm856, %v843, %v461
        %v861 = vsel %vm856, %v844, %v463
        %v862 = vsel %vm856, %v845, %v465
        %v863 = vsel %vm856, %v846, %v467
        %v864 = vsel %vm856, %v847, %v469
        %v865 = vsel %vm856, %v848, %v471
        %v866 = vsel %vm856, %v849, %v473
        %v867 = vsel %vm856, %v850, %v475
        %v868 = vsel %vm856, %v851, %v477
        %v869 = vsel %vm856, %v852, %v479
        %v870 = vsel %vm856, %v853, %v481
        %v871 = vsel %vm856, %v854, %v483
        %v872 = vsel %vm856, %v855, %v485
        %vm873 = vcmask 130048
        %v874 = vsel %vm873, %v857, %v519
        %v875 = vsel %vm873, %v858, %v521
        %v876 = vsel %vm873, %v859, %v523
        %v877 = vsel %vm873, %v860, %v525
        %v878 = vsel %vm873, %v861, %v527
        %v879 = vsel %vm873, %v862, %v529
        %v880 = vsel %vm873, %v863, %v531
        %v881 = vsel %vm873, %v864, %v533
        %v882 = vsel %vm873, %v865, %v535
        %v883 = vsel %vm873, %v866, %v537
        %v884 = vsel %vm873, %v867, %v539
        %v885 = vsel %vm873, %v868, %v541
        %v886 = vsel %vm873, %v869, %v543
        %v887 = vsel %vm873, %v870, %v545
        %v888 = vsel %vm873, %v871, %v547
        %v889 = vsel %vm873, %v872, %v549
        %vm890 = vcmask 162816
        %v891 = vsel %vm890, %v874, %v583
        %v892 = vsel %vm890, %v875, %v585
        %v893 = vsel %vm890, %v876, %v587
        %v894 = vsel %vm890, %v877, %v589
        %v895 = vsel %vm890, %v878, %v591
        %v896 = vsel %vm890, %v879, %v593
        %v897 = vsel %vm890, %v880, %v595
        %v898 = vsel %vm890, %v881, %v597
        %v899 = vsel %vm890, %v882, %v599
        %v900 = vsel %vm890, %v883, %v601
        %v901 = vsel %vm890, %v884, %v603
        %v902 = vsel %vm890, %v885, %v605
        %v903 = vsel %vm890, %v886, %v607
        %v904 = vsel %vm890, %v887, %v609
        %v905 = vsel %vm890, %v888, %v611
        %v906 = vsel %vm890, %v889, %v613
        %vm907 = vcmask 195584
        %v908 = vsel %vm907, %v891, %v647
        %v909 = vsel %vm907, %v892, %v649
        %v910 = vsel %vm907, %v893, %v651
        %v911 = vsel %vm907, %v894, %v653
        %v912 = vsel %vm907, %v895, %v655
        %v913 = vsel %vm907, %v896, %v657
        %v914 = vsel %vm907, %v897, %v659
        %v915 = vsel %vm907, %v898, %v661
        %v916 = vsel %vm907, %v899, %v663
        %v917 = vsel %vm907, %v900, %v665
        %v918 = vsel %vm907, %v901, %v667
        %v919 = vsel %vm907, %v902, %v669
        %v920 = vsel %vm907, %v903, %v671
        %v921 = vsel %vm907, %v904, %v673
        %v922 = vsel %vm907, %v905, %v675
        %v923 = vsel %vm907, %v906, %v677
        %vm924 = vcmask 228352
        %v925 = vsel %vm924, %v908, %v711
        %v926 = vsel %vm924, %v909, %v713
        %v927 = vsel %vm924, %v910, %v715
        %v928 = vsel %vm924, %v911, %v717
        %v929 = vsel %vm924, %v912, %v719
        %v930 = vsel %vm924, %v913, %v721
        %v931 = vsel %vm924, %v914, %v723
        %v932 = vsel %vm924, %v915, %v725
        %v933 = vsel %vm924, %v916, %v727
        %v934 = vsel %vm924, %v917, %v729
        %v935 = vsel %vm924, %v918, %v731
        %v936 = vsel %vm924, %v919, %v733
        %v937 = vsel %vm924, %v920, %v735
        %v938 = vsel %vm924, %v921, %v737
        %v939 = vsel %vm924, %v922, %v739
        %v940 = vsel %vm924, %v923, %v741
        %vm941 = vcmask 261120
        %v942 = vsel %vm941, %v925, %v775
        %v943 = vsel %vm941, %v926, %v777
        %v944 = vsel %vm941, %v927, %v779
        %v945 = vsel %vm941, %v928, %v781
        %v946 = vsel %vm941, %v929, %v783
        %v947 = vsel %vm941, %v930, %v785
        %v948 = vsel %vm941, %v931, %v787
        %v949 = vsel %vm941, %v932, %v789
        %v950 = vsel %vm941, %v933, %v791
        %v951 = vsel %vm941, %v934, %v793
        %v952 = vsel %vm941, %v935, %v795
        %v953 = vsel %vm941, %v936, %v797
        %v954 = vsel %vm941, %v937, %v799
        %v955 = vsel %vm941, %v938, %v801
        %v956 = vsel %vm941, %v939, %v803
        %v957 = vsel %vm941, %v940, %v805
        %v958 = vld [vmem:[%s1] sm:$0xff]
        %v959 = vld [vmem:[%s1 + $0x8] sm:$0xff]
        %v960 = vld [vmem:[%s1 + $0x10] sm:$0xff]
        %v961 = vld [vmem:[%s1 + $0x18] sm:$0xff]
        %v962 = vld [vmem:[%s1 + $0x20] sm:$0xf]
        %vm963 = vcmask 293888
        %v965 = vsel %vm963, %v942, 0
        %v968 = vsel %vm963, %v943, 0
        %v971 = vsel %vm963, %v944, 0
        %v974 = vsel %vm963, %v945, 0
        %v977 = vsel %vm963, %v946, 0
        %v980 = vsel %vm963, %v947, 0
        %v983 = vsel %vm963, %v948, 0
        %v986 = vsel %vm963, %v949, 0
        %v989 = vsel %vm963, %v950, 0
        %v992 = vsel %vm963, %v951, 0
        %v995 = vsel %vm963, %v952, 0
        %v998 = vsel %vm963, %v953, 0
        %v1001 = vsel %vm963, %v954, 0
        %v1004 = vsel %vm963, %v955, 0
        %v1007 = vsel %vm963, %v956, 0
        %v1010 = vsel %vm963, %v957, 0
        %vm1012 = vcmask 1043456
        %v1014 = vsel %vm1012, %v962, 0
        %1016 = vmatprep.subr.mxu0 0.0
        %1017 = vmatpush1.msra.mxu0 0.0
        %1018 = vmatprep.subr.mxu0 0.0
        %1019 = vmatpush1.msra.mxu0 0.0
        %1020 = vmatprep.subr.mxu0 0.0
        %1021 = vmatpush1.msra.mxu0 0.0
        %1022 = vmatprep.subr.mxu0 0.0
        %1023 = vmatpush1.msra.mxu0 0.0
        %1024 = vmatprep.subr.mxu0 0.0
        %1025 = vmatpush1.msra.mxu0 0.0
        %1026 = vmatprep.subr.mxu0 0.0
        %1027 = vmatpush1.msra.mxu0 0.0
        %1028 = vmatprep.subr.mxu0 0.0
        %1029 = vmatpush1.msra.mxu0 0.0
        %1030 = vmatprep.subr.mxu0 0.0
        %1031 = vmatpush1.msra.mxu0 0.0
        %1032 = vmatprep.subr.mxu0 0.0
        %1033 = vmatpush1.msra.mxu0 0.0
        %1034 = vmatprep.subr.mxu0 0.0
        %1035 = vmatpush1.msra.mxu0 0.0
        %1036 = vmatprep.subr.mxu0 0.0
        %1037 = vmatpush1.msra.mxu0 0.0
        %1038 = vmatprep.subr.mxu0 0.0
        %1039 = vmatpush1.msra.mxu0 %v1014
        %1040 = vmatprep.subr.mxu0 0.0
        %1041 = vmatpush1.msra.mxu0 %v961
        %1042 = vmatprep.subr.mxu0 0.0
        %1043 = vmatpush1.msra.mxu0 %v960
        %1044 = vmatprep.subr.mxu0 0.0
        %1045 = vmatpush1.msra.mxu0 %v959
        %1046 = vmatprep.subr.mxu0 0.0
        %1047 = vmatpush1.msra.mxu0 %v958
        %1048 = vmatprep.subr.mxu0 0.0
        %1049 = vmatpush2.msra.mxu0 0.0
        %1050 = vmatprep.subr.mxu0 0.0
        %1051 = vmatpush2.msra.mxu0 0.0
        %1052 = vmatprep.subr.mxu0 0.0
        %1053 = vmatpush2.msra.mxu0 0.0
        %1054 = vmatprep.subr.mxu0 0.0
        %1055 = vmatpush2.msra.mxu0 0.0
        %1056 = vmatprep.subr.mxu0 0.0
        %1057 = vmatpush2.msra.mxu0 0.0
        %1058 = vmatprep.subr.mxu0 0.0
        %1059 = vmatpush2.msra.mxu0 0.0
        %1060 = vmatprep.subr.mxu0 0.0
        %1061 = vmatpush2.msra.mxu0 0.0
        %1062 = vmatprep.subr.mxu0 0.0
        %1063 = vmatpush2.msra.mxu0 0.0
        %1064 = vmatprep.subr.mxu0 0.0
        %1065 = vmatpush2.msra.mxu0 0.0
        %1066 = vmatprep.subr.mxu0 0.0
        %1067 = vmatpush2.msra.mxu0 0.0
        %1068 = vmatprep.subr.mxu0 0.0
        %1069 = vmatpush2.msra.mxu0 0.0
        %1070 = vmatprep.subr.mxu0 0.0
        %1071 = vmatpush2.msra.mxu0 0.0
        %1072 = vmatprep.subr.mxu0 0.0
        %1073 = vmatpush2.msra.mxu0 0.0
        %1074 = vmatprep.subr.mxu0 0.0
        %1075 = vmatpush2.msra.mxu0 0.0
        %1076 = vmatprep.subr.mxu0 0.0
        %1077 = vmatpush2.msra.mxu0 0.0
        %1078 = vmatprep.subr.mxu0 0.0
        %1079 = vmatpush2.msra.mxu0 0.0
        %1080 = vmatprep.mubr.f32.mxu0 0.0
        %1081 = vmatmul.mubr.f32.gmra.mxu0 %v965
        %v1082 = vpop.f32.mrf.mxu0
        %v1083 = vadd.f32 0.0, %v1082
        %v1084 = vpop.f32.mrf.mxu0
        %1085 = vmatprep.mubr.f32.mxu0 0.0
        %1086 = vmatmul.mubr.f32.gmra.mxu0 %v968
        %v1087 = vpop.f32.mrf.mxu0
        %v1088 = vadd.f32 0.0, %v1087
        %v1089 = vpop.f32.mrf.mxu0
        %1090 = vmatprep.mubr.f32.mxu0 0.0
        %1091 = vmatmul.mubr.f32.gmra.mxu0 %v971
        %v1092 = vpop.f32.mrf.mxu0
        %v1093 = vadd.f32 0.0, %v1092
        %v1094 = vpop.f32.mrf.mxu0
        %1095 = vmatprep.mubr.f32.mxu0 0.0
        %1096 = vmatmul.mubr.f32.gmra.mxu0 %v974
        %v1097 = vpop.f32.mrf.mxu0
        %v1098 = vadd.f32 0.0, %v1097
        %v1099 = vpop.f32.mrf.mxu0
        %1100 = vmatprep.mubr.f32.mxu0 0.0
        %1101 = vmatmul.mubr.f32.gmra.mxu0 %v977
        %v1102 = vpop.f32.mrf.mxu0
        %v1103 = vadd.f32 0.0, %v1102
        %v1104 = vpop.f32.mrf.mxu0
        %1105 = vmatprep.mubr.f32.mxu0 0.0
        %1106 = vmatmul.mubr.f32.gmra.mxu0 %v980
        %v1107 = vpop.f32.mrf.mxu0
        %v1108 = vadd.f32 0.0, %v1107
        %v1109 = vpop.f32.mrf.mxu0
        %1110 = vmatprep.mubr.f32.mxu0 0.0
        %1111 = vmatmul.mubr.f32.gmra.mxu0 %v983
        %v1112 = vpop.f32.mrf.mxu0
        %v1113 = vadd.f32 0.0, %v1112
        %v1114 = vpop.f32.mrf.mxu0
        %1115 = vmatprep.mubr.f32.mxu0 0.0
        %1116 = vmatmul.mubr.f32.gmra.mxu0 %v986
        %v1117 = vpop.f32.mrf.mxu0
        %v1118 = vadd.f32 0.0, %v1117
        %v1119 = vpop.f32.mrf.mxu0
        %1120 = vmatprep.mubr.f32.mxu0 0.0
        %1121 = vmatmul.mubr.f32.gmra.mxu0 %v989
        %v1122 = vpop.f32.mrf.mxu0
        %v1123 = vadd.f32 0.0, %v1122
        %v1124 = vpop.f32.mrf.mxu0
        %1125 = vmatprep.mubr.f32.mxu0 0.0
        %1126 = vmatmul.mubr.f32.gmra.mxu0 %v992
        %v1127 = vpop.f32.mrf.mxu0
        %v1128 = vadd.f32 0.0, %v1127
        %v1129 = vpop.f32.mrf.mxu0
        %1130 = vmatprep.mubr.f32.mxu0 0.0
        %1131 = vmatmul.mubr.f32.gmra.mxu0 %v995
        %v1132 = vpop.f32.mrf.mxu0
        %v1133 = vadd.f32 0.0, %v1132
        %v1134 = vpop.f32.mrf.mxu0
        %1135 = vmatprep.mubr.f32.mxu0 0.0
        %1136 = vmatmul.mubr.f32.gmra.mxu0 %v998
        %v1137 = vpop.f32.mrf.mxu0
        %v1138 = vadd.f32 0.0, %v1137
        %v1139 = vpop.f32.mrf.mxu0
        %1140 = vmatprep.mubr.f32.mxu0 0.0
        %1141 = vmatmul.mubr.f32.gmra.mxu0 %v1001
        %v1142 = vpop.f32.mrf.mxu0
        %v1143 = vadd.f32 0.0, %v1142
        %v1144 = vpop.f32.mrf.mxu0
        %1145 = vmatprep.mubr.f32.mxu0 0.0
        %1146 = vmatmul.mubr.f32.gmra.mxu0 %v1004
        %v1147 = vpop.f32.mrf.mxu0
        %v1148 = vadd.f32 0.0, %v1147
        %v1149 = vpop.f32.mrf.mxu0
        %1150 = vmatprep.mubr.f32.mxu0 0.0
        %1151 = vmatmul.mubr.f32.gmra.mxu0 %v1007
        %v1152 = vpop.f32.mrf.mxu0
        %v1153 = vadd.f32 0.0, %v1152
        %v1154 = vpop.f32.mrf.mxu0
        %1155 = vmatprep.mubr.f32.mxu0 0.0
        %1156 = vmatmul.mubr.f32.gmra.mxu0 %v1010
        %v1157 = vpop.f32.mrf.mxu0
        %v1158 = vadd.f32 0.0, %v1157
        %v1159 = vpop.f32.mrf.mxu0
        %1160 = vdwg.mxu0
        %1161 = vst [vmem:[%s150] sm:$0xff] %v1083
        %1162 = vst [vmem:[%s150 + $0x8] sm:$0xff] %v1088
        %1163 = vst [vmem:[%s150 + $0x10] sm:$0xff] %v1093
        %1164 = vst [vmem:[%s150 + $0x18] sm:$0xff] %v1098
        %1165 = vst [vmem:[%s150 + $0x20] sm:$0xff] %v1103
        %1166 = vst [vmem:[%s150 + $0x28] sm:$0xff] %v1108
        %1167 = vst [vmem:[%s150 + $0x30] sm:$0xff] %v1113
        %1168 = vst [vmem:[%s150 + $0x38] sm:$0xff] %v1118
        %1169 = vst [vmem:[%s150 + $0x40] sm:$0xff] %v1123
        %1170 = vst [vmem:[%s150 + $0x48] sm:$0xff] %v1128
        %1171 = vst [vmem:[%s150 + $0x50] sm:$0xff] %v1133
        %1172 = vst [vmem:[%s150 + $0x58] sm:$0xff] %v1138
        %1173 = vst [vmem:[%s150 + $0x60] sm:$0xff] %v1143
        %1174 = vst [vmem:[%s150 + $0x68] sm:$0xff] %v1148
        %1175 = vst [vmem:[%s150 + $0x70] sm:$0xff] %v1153
        %1176 = vst [vmem:[%s150 + $0x78] sm:$0xff] %v1158
        %s1177 = sand.u32 %s85, 1
        %s1178 = scalar_lea.sflag [#allocation3], %s1177
        %s1179 = sand.u32 %s85, 1
        %s1180 = smul.addr %s1179, 128
        %s1181 = scalar_lea.vmem [#allocation2], %s1180
        // Predicated region
        $region29: #{tpu_custom_call.1} parent=27 // pred_check
          %p1182 = pneg %p95
        $region30: #{tpu_custom_call.1} parent=27 // pred_check_branch
          %1184 = sbr.rel (%p1182) target = $region32
        $region31: #{tpu_custom_call.1} parent=27 // pred_region
          %s1185 = smul.u32 8, %s21
          %s1187 = ssub.s32 2048, 2048
          %1188 = vsyncadd %s1178, %s1187
          %s1189 = smul.addr %s1185, 2
          %s1190 = smul.addr %s20, 32
          %s1191 = sadd.s32 %s1189, %s1190
          %s1192 = smul.addr %s1191, 128
          %s1193 = scalar_lea.hbm %s2, %s1192
          %s1194 = sshll.u32 %s1181, 4
          %s1195 = int_to_ptr.vmem [resolvable:$true] %s1194
          %1200 = dma.vmem_to_hbm [thread:$0]  %s1195, 2048, %s1193, %s1178, 128, 128, 8
        $region32: #{tpu_custom_call.1} parent=27 // pred_fallthru
          _
      $region28: #{tpu_custom_call.1} parent=5 // pred_fallthru
        _
      %p1201 = scmp.le.s32.totalorder 2, %s11
      // Predicated region
      $region33: #{tpu_custom_call.1} parent=5 // pred_check
        %p1202 = pneg %p1201
      $region34: #{tpu_custom_call.1} parent=5 // pred_check_branch
        %1204 = sbr.rel (%p1202) target = $region36
      $region35: #{tpu_custom_call.1} parent=5 // pred_region
        %s1205 = ssub.s32 %s11, 2
        // Predicated region
        $region37: #{tpu_custom_call.1} parent=35 // pred_check
          %p1206 = pneg %p101
        $region38: #{tpu_custom_call.1} parent=35 // pred_check_branch
          %1208 = sbr.rel (%p1206) target = $region40
        $region39: #{tpu_custom_call.1} parent=35 // pred_region
          %s1209 = sand.u32 %s86, 1
          %s1210 = scalar_lea.sflag [#allocation3], %s1209
          %s1211 = sand.u32 %s86, 1
          %s1212 = smul.addr %s1211, 128
          %s1213 = scalar_lea.vmem [#allocation2], %s1212
          %1214 = dma.done %s1210, 2048
        $region40: #{tpu_custom_call.1} parent=35 // pred_fallthru
          _
      $region36: #{tpu_custom_call.1} parent=5 // pred_fallthru
        _
    $region6: #{tpu_custom_call.1} parent=1 // loop_footer
      %s15 = sadd.s32 1, %s11
    $region7: #{tpu_custom_call.1} parent=1 // loop_footer_branch
      %10 = sbr.rel target = $region3
    $region8: #{tpu_custom_call.1} parent=1 // loop_exit
      _
    %1215 = vsyncpa [#allocation3], 1
    %s1216 = scalar_lea.sflag [#allocation3], 1
    %1217 = vsyncpa %s1216, 1

</llo_original>
